<compile_context>
chip_gen: v7x
topology: tpu7x:2x2x1
jax: 0.10.0
libtpu: 0.0.40
codegen_flags: <defaults>
</compile_context>

<pallas_src>
import jax
import jax.numpy as jnp
from jax.experimental import pallas as pl
from jax.experimental.pallas import tpu as pltpu


def _round_up(x, m):
    return (x + m - 1) // m * m


def mlp_softmax_kernel(x_ref, w1_ref, b1_ref, w2_ref, b2_ref, o_ref):
    # Dropout is identity at inference time (nn.Dropout in eval mode).
    x = x_ref[...]                                               # [TB, 512] f32
    # Linear(512, H) + ReLU on the MXU, f32 accumulation.
    h = jnp.dot(x, w1_ref[...], preferred_element_type=jnp.float32)
    h = jnp.maximum(h + b1_ref[...], 0.0)                        # [TB, H]
    # Linear(H, Dout).
    logits = jnp.dot(h, w2_ref[...], preferred_element_type=jnp.float32)
    logits = logits + b2_ref[...]                                # [TB, Dout]
    # Softmax over dim=1 (class axis), numerically stable, exact divide.
    m = jnp.max(logits, axis=1, keepdims=True)
    e = jnp.exp(logits - m)
    o_ref[...] = e / jnp.sum(e, axis=1, keepdims=True)
    # TODO(synk): softmax_sigmoid='sigmoid' branch not wired up; this kernel
    # implements the default softmax path of the module's forward().


def hemmer_network_forward(features, w1, b1, w2, b2, *, block_b=1024):
    """features: [B, 512] f32; returns softmax probs [B, output_size] f32.

    block_b: upper bound on the batch-tile (rows per grid step). The actual
    tile is a multiple of 8 rows, capped so the grid has at least 4 steps
    (>= 2 per TensorCore on v7x megacore). A batch that is not a multiple of
    the tile is handled by Pallas' partial last block: padded rows are never
    written back, so no wrapper-side jnp.pad copy is needed.
    """
    B, Din = features.shape
    H = w1.shape[1]
    Dout = w2.shape[1]

    # All-f32 path: the dominant HBM stream (features) is read exactly once,
    # and matmul compute is tiny, so there is no benefit to a separate
    # bf16-cast pass (which would add a full extra HBM read+write).
    features = features.astype(jnp.float32)
    w1 = w1.astype(jnp.float32)
    w2 = w2.astype(jnp.float32)
    b1_2d = b1.reshape(1, H).astype(jnp.float32)
    b2_2d = b2.reshape(1, Dout).astype(jnp.float32)

    # Batch tile: multiple of 8 sublanes (f32); >= 4 grid steps for v7x
    # megacore + DMA/compute overlap; capped by block_b (default 1024 keeps
    # double-buffered tiles ~7 MiB, inside v5e's 16 MiB scoped-VMEM default).
    tb = min(_round_up(block_b, 8), _round_up(pl.cdiv(B, 4), 8))
    tb = max(8, min(tb, _round_up(B, 8)))
    grid = (pl.cdiv(B, tb),)

    # Rough VMEM footprint: double-buffered feature/output tiles, lane-padded
    # weights and f32 intermediates. Only override the compiler default when
    # a large block_b actually needs the headroom.
    lane = 128
    vmem_est = (
        2 * tb * Din * 4
        + 2 * tb * max(Dout, lane) * 4
        + (Din * _round_up(H, lane) + _round_up(H, 8) * max(Dout, lane) + 2 * lane) * 4
        + 4 * tb * max(H, lane) * 4
    )
    compiler_kwargs = dict(dimension_semantics=("parallel",))
    if vmem_est > 12 * 1024 * 1024:
        compiler_kwargs["vmem_limit_bytes"] = int(min(2 * vmem_est, 48 * 1024 * 1024))

    out = pl.pallas_call(
        mlp_softmax_kernel,
        out_shape=jax.ShapeDtypeStruct((B, Dout), jnp.float32),
        grid=grid,
        in_specs=[
            # features: streamed per batch tile (double-buffered by Pallas).
            pl.BlockSpec((tb, Din), lambda i: (i, 0)),
            # weights / biases: constant index_map -> VMEM-resident all grid.
            pl.BlockSpec((Din, H), lambda i: (0, 0)),
            pl.BlockSpec((1, H), lambda i: (0, 0)),
            pl.BlockSpec((H, Dout), lambda i: (0, 0)),
            pl.BlockSpec((1, Dout), lambda i: (0, 0)),
        ],
        out_specs=pl.BlockSpec((tb, Dout), lambda i: (i, 0)),
        compiler_params=pltpu.CompilerParams(**compiler_kwargs),
    )(features, w1, b1_2d, w2, b2_2d)
    return out


def init_params(key, in_features=512, hidden=32, output_size=10):
    """Deterministic PyTorch-style Linear init: U(-1/sqrt(fan_in), 1/sqrt(fan_in))."""
    k1, k2, k3, k4 = jax.random.split(key, 4)
    bound1 = 1.0 / jnp.sqrt(in_features)
    bound2 = 1.0 / jnp.sqrt(hidden)
    w1 = jax.random.uniform(k1, (in_features, hidden), jnp.float32, -bound1, bound1)
    b1 = jax.random.uniform(k2, (in_features and hidden,), jnp.float32, -bound1, bound1)
    w2 = jax.random.uniform(k3, (hidden, output_size), jnp.float32, -bound2, bound2)
    b2 = jax.random.uniform(k4, (output_size,), jnp.float32, -bound2, bound2)
    return w1, b1, w2, b2


if __name__ == "__main__":
    key = jax.random.PRNGKey(0)
    k_feat, k_param = jax.random.split(key)

    B = 64               # small demo batch (grid still has 4 steps)
    IN = 512             # fixed by the module (Linear(512, ...))
    HIDDEN = 32          # param['L2D']['HEMMER']['NUM_HIDDEN_UNITS']
    OUT = 10             # output_size

    features = jax.random.normal(k_feat, (B, IN), jnp.float32)
    w1, b1, w2, b2 = init_params(k_param, IN, HIDDEN, OUT)

    probs = hemmer_network_forward(features, w1, b1, w2, b2)
    jax.block_until_ready(probs)
    assert probs.shape == (B, OUT)

    # Pure-JAX f32 reference (high-precision matmuls).
    ref_h = jnp.maximum(
        jnp.dot(features, w1, precision=jax.lax.Precision.HIGHEST) + b1, 0.0)
    ref_logits = jnp.dot(ref_h, w2, precision=jax.lax.Precision.HIGHEST) + b2
    ref = jax.nn.softmax(ref_logits, axis=1)

    row_sums = jnp.sum(probs, axis=1)
    assert bool(jnp.all(jnp.abs(row_sums - 1.0) < 1e-3))
    assert bool(jnp.all(jnp.abs(probs - ref) < 5e-3))

    # Remainder path: batch not a multiple of the tile -> partial last block
    # (no jnp.pad copy; out-of-range rows are never written back).
    B2 = 50
    probs2 = hemmer_network_forward(features[:B2], w1, b1, w2, b2)
    jax.block_until_ready(probs2)
    assert probs2.shape == (B2, OUT)
    assert bool(jnp.all(jnp.abs(probs2 - ref[:B2]) < 5e-3))

    print("KERNEL_OK")
</pallas_src>

<mosaic_0001>
module attributes {stable_mosaic.version = 11 : i64} {
  func.func @mlp_softmax_kernel(%arg0: i32, %arg1: memref<16x512xf32, #tpu.memory_space<vmem>>, %arg2: memref<512x32xf32, #tpu.memory_space<vmem>>, %arg3: memref<1x32xf32, #tpu.memory_space<vmem>>, %arg4: memref<32x10xf32, #tpu.memory_space<vmem>>, %arg5: memref<1x10xf32, #tpu.memory_space<vmem>>, %arg6: memref<16x10xf32, #tpu.memory_space<vmem>>) attributes {dimension_semantics = [#tpu.dimension_semantics<parallel>], iteration_bounds = array<i64: 4>, scalar_prefetch = 0 : i64, scratch_operands = 0 : i64, tpu.core_type = #tpu.core_type<tc>, window_params = [{transform_indices = @transform_0, window_bounds = array<i64: 16, 512>}, {pipeline_mode = #tpu.pipeline_mode<synchronous>, transform_indices = @transform_1, window_bounds = array<i64: 512, 32>}, {pipeline_mode = #tpu.pipeline_mode<synchronous>, transform_indices = @transform_2, window_bounds = array<i64: 1, 32>}, {pipeline_mode = #tpu.pipeline_mode<synchronous>, transform_indices = @transform_3, window_bounds = array<i64: 32, 10>}, {pipeline_mode = #tpu.pipeline_mode<synchronous>, transform_indices = @transform_4, window_bounds = array<i64: 1, 10>}, {transform_indices = @transform_5, window_bounds = array<i64: 16, 10>}]} {
    %c0 = arith.constant 0 : index
    %c0_0 = arith.constant 0 : index
    %0 = vector.load %arg1[%c0, %c0_0] : memref<16x512xf32, #tpu.memory_space<vmem>>, vector<16x512xf32>
    %c0_1 = arith.constant 0 : index
    %c0_2 = arith.constant 0 : index
    %1 = vector.load %arg2[%c0_1, %c0_2] : memref<512x32xf32, #tpu.memory_space<vmem>>, vector<512x32xf32>
    %cst = arith.constant dense<0.000000e+00> : vector<16x32xf32>
    %2 = tpu.matmul %0, %1, %cst {dimension_numbers = #tpu.dot_dimension_numbers<[1], [0], [0], [1], [0, 0, 1, 1], [], []>} : vector<16x512xf32>, vector<512x32xf32>, vector<16x32xf32> -> vector<16x32xf32>
    %c0_3 = arith.constant 0 : index
    %c0_4 = arith.constant 0 : index
    %3 = vector.load %arg3[%c0_3, %c0_4] : memref<1x32xf32, #tpu.memory_space<vmem>>, vector<1x32xf32>
    %4 = vector.broadcast %3 : vector<1x32xf32> to vector<16x32xf32>
    %5 = arith.addf %2, %4 : vector<16x32xf32>
    %cst_5 = arith.constant 0.000000e+00 : f32
    %6 = vector.broadcast %cst_5 : f32 to vector<16x32xf32>
    %7 = arith.maximumf %5, %6 : vector<16x32xf32>
    %c0_6 = arith.constant 0 : index
    %c0_7 = arith.constant 0 : index
    %8 = vector.load %arg4[%c0_6, %c0_7] : memref<32x10xf32, #tpu.memory_space<vmem>>, vector<32x10xf32>
    %cst_8 = arith.constant dense<0.000000e+00> : vector<16x10xf32>
    %9 = tpu.matmul %7, %8, %cst_8 {dimension_numbers = #tpu.dot_dimension_numbers<[1], [0], [0], [1], [0, 0, 1, 1], [], []>} : vector<16x32xf32>, vector<32x10xf32>, vector<16x10xf32> -> vector<16x10xf32>
    %c0_9 = arith.constant 0 : index
    %c0_10 = arith.constant 0 : index
    %10 = vector.load %arg5[%c0_9, %c0_10] : memref<1x10xf32, #tpu.memory_space<vmem>>, vector<1x10xf32>
    %11 = vector.broadcast %10 : vector<1x10xf32> to vector<16x10xf32>
    %12 = arith.addf %9, %11 : vector<16x10xf32>
    %cst_11 = arith.constant dense<0xFF800000> : vector<16xf32>
    %13 = vector.multi_reduction <maximumf>, %12, %cst_11 [1] : vector<16x10xf32> to vector<16xf32>
    %14 = vector.shape_cast %13 : vector<16xf32> to vector<16x1xf32>
    %15 = vector.broadcast %14 : vector<16x1xf32> to vector<16x10xf32>
    %16 = arith.subf %12, %15 : vector<16x10xf32>
    %17 = math.exp %16 : vector<16x10xf32>
    %cst_12 = arith.constant dense<0.000000e+00> : vector<16xf32>
    %18 = vector.multi_reduction <add>, %17, %cst_12 [1] : vector<16x10xf32> to vector<16xf32>
    %19 = vector.shape_cast %18 : vector<16xf32> to vector<16x1xf32>
    %20 = vector.broadcast %19 : vector<16x1xf32> to vector<16x10xf32>
    %21 = arith.divf %17, %20 : vector<16x10xf32>
    %c0_13 = arith.constant 0 : index
    %c0_14 = arith.constant 0 : index
    %22 = vector.load %arg6[%c0_13, %c0_14] : memref<16x10xf32, #tpu.memory_space<vmem>>, vector<16x10xf32>
    tpu.vector_store %arg6[%c0_13, %c0_14], %21 {strides = array<i32>} : memref<16x10xf32, #tpu.memory_space<vmem>>, vector<16x10xf32>,
    return
  }
  func.func @transform_0(%arg0: i32) -> (i32, i32) {
    %c0_i32 = arith.constant 0 : i32
    %c0_i32_0 = arith.constant 0 : i32
    return %arg0, %c0_i32 : i32, i32
  }
  func.func @transform_1(%arg0: i32) -> (i32, i32) {
    %c0_i32 = arith.constant 0 : i32
    %c0_i32_0 = arith.constant 0 : i32
    %c0_i32_1 = arith.constant 0 : i32
    return %c0_i32, %c0_i32_0 : i32, i32
  }
  func.func @transform_2(%arg0: i32) -> (i32, i32) {
    %c0_i32 = arith.constant 0 : i32
    %c0_i32_0 = arith.constant 0 : i32
    %c0_i32_1 = arith.constant 0 : i32
    return %c0_i32, %c0_i32_0 : i32, i32
  }
  func.func @transform_3(%arg0: i32) -> (i32, i32) {
    %c0_i32 = arith.constant 0 : i32
    %c0_i32_0 = arith.constant 0 : i32
    %c0_i32_1 = arith.constant 0 : i32
    return %c0_i32, %c0_i32_0 : i32, i32
  }
  func.func @transform_4(%arg0: i32) -> (i32, i32) {
    %c0_i32 = arith.constant 0 : i32
    %c0_i32_0 = arith.constant 0 : i32
    %c0_i32_1 = arith.constant 0 : i32
    return %c0_i32, %c0_i32_0 : i32, i32
  }
  func.func @transform_5(%arg0: i32) -> (i32, i32) {
    %c0_i32 = arith.constant 0 : i32
    %c0_i32_0 = arith.constant 0 : i32
    return %arg0, %c0_i32 : i32, i32
  }
}

</mosaic_0001>

<llo_original>
// kernel: tpu_custom_call.1
$region0: #{tpu_custom_call.1}
  #allocation0 [shape = 'u32[]', space=smem, size = 0x4, offset = 0x4, fixed_abs, tag = 'smem constant byte address 0x4 - core index']
  #allocation1 [shape = 'u32[144,128]{1,0:T(1,128)}', space=vmem, size = 0x12000, scoped, tag = 'internal scratch']
  %s0 = inlined_call_operand.vmem [shape: f32[64,512], index: 0, kind: input, shape index: {}]
  %s1 = inlined_call_operand.vmem [shape: f32[512,32], index: 1, kind: input, shape index: {}]
  %s2 = inlined_call_operand.vmem [shape: f32[1,32], index: 2, kind: input, shape index: {}]
  %s3 = inlined_call_operand.vmem [shape: f32[32,10], index: 3, kind: input, shape index: {}]
  %s4 = inlined_call_operand.vmem [shape: f32[1,10], index: 4, kind: input, shape index: {}]
  %s5 = inlined_call_operand.vmem [shape: f32[64,10], index: 5, kind: output, shape index: {}]
  %s6 = sld [smem:[#allocation0]]
  $region53: #{tpu_custom_call.1} parent=0
    _
  %s8 = ssub.s32 1, %s6
  %s9 = scalar_select 0, %s8, %s6
  loop: start=0, step=1, limit=6
  $region2: #{tpu_custom_call.1} parent=0 // loop_pre_header
    _
  $region3: #{tpu_custom_call.1} parent=0 // loop_header
    %s11 = sphi 0, %s15
    %p12 = scmp.ge.s32.totalorder %s11, 6
    %s21 = sphi 0, %s23
    %s24 = sphi 0, %s21
    %s25 = sphi 0, %s24
    %s41 = sphi 0, %s25
    %s45 = sphi 0, %s45
    %s47 = sphi 0, %s45
    %s48 = sphi 0, %s47
    %s62 = sphi 0, %s48
    %s66 = sphi 0, %s66
    %s68 = sphi 0, %s66
    %s69 = sphi 0, %s68
    %s83 = sphi 0, %s69
    %s87 = sphi 0, %s87
    %s89 = sphi 0, %s87
    %s90 = sphi 0, %s89
    %s104 = sphi 0, %s90
    %s108 = sphi 0, %s108
    %s110 = sphi 0, %s108
    %s111 = sphi 0, %s110
    %s125 = sphi 0, %s111
    %s131 = sphi 0, %s133
    %s134 = sphi 0, %s131
    %s135 = sphi 0, %s134
    %s151 = sphi 0, %s135
  $region4: #{tpu_custom_call.1} parent=0 // loop_header_branch
    %14 = sbr.rel (%p12) target = $region8
  $region5: #{tpu_custom_call.1} parent=0 // loop_body
    %s16 = ssub.s32 %s11, 1
    %s17 = ssub.s32 %s11, 2
    %s18 = sadd.s32 %s11, 1
    %s19 = ssub.s32 %s11, %s18
    %p20 = scmp.eq.s32.totalorder %s19, 0
    %s22 = sadd.s32 %s21, 1
    %s23 = scalar_select %p20, %s21, %s22
    %p26 = pneg %p20
    %p27 = scmp.eq.s32.totalorder %s11, 3
    %p28 = por %p26, %p27
    %p29 = scmp.ne.s32.totalorder %s21, %s24
    %p30 = scmp.eq.s32.totalorder %s11, 0
    %p31 = por %p29, %p30
    %p32 = scmp.ne.s32.totalorder %s21, %s24
    %p33 = scmp.eq.s32.totalorder %s16, 3
    %p34 = por %p32, %p33
    %p35 = scmp.ne.s32.totalorder %s24, %s25
    %p36 = scmp.eq.s32.totalorder %s16, 0
    %p37 = por %p35, %p36
    %p38 = scmp.ne.s32.totalorder %s24, %s25
    %p39 = scmp.eq.s32.totalorder %s17, 3
    %p40 = por %p38, %p39
    %p42 = scmp.ne.s32.totalorder %s25, %s41
    %p43 = scmp.eq.s32.totalorder %s17, 0
    %p44 = por %p42, %p43
    %s46 = sadd.s32 %s45, 1
    %p49 = scmp.eq.s32.totalorder %s11, 3
    %p50 = scmp.ne.s32.totalorder %s45, %s47
    %p51 = scmp.eq.s32.totalorder %s11, 0
    %p52 = por %p50, %p51
    %p53 = scmp.ne.s32.totalorder %s45, %s47
    %p54 = scmp.eq.s32.totalorder %s16, 3
    %p55 = por %p53, %p54
    %p56 = scmp.ne.s32.totalorder %s47, %s48
    %p57 = scmp.eq.s32.totalorder %s16, 0
    %p58 = por %p56, %p57
    %p59 = scmp.ne.s32.totalorder %s47, %s48
    %p60 = scmp.eq.s32.totalorder %s17, 3
    %p61 = por %p59, %p60
    %p63 = scmp.ne.s32.totalorder %s48, %s62
    %p64 = scmp.eq.s32.totalorder %s17, 0
    %p65 = por %p63, %p64
    %s67 = sadd.s32 %s66, 1
    %p70 = scmp.eq.s32.totalorder %s11, 3
    %p71 = scmp.ne.s32.totalorder %s66, %s68
    %p72 = scmp.eq.s32.totalorder %s11, 0
    %p73 = por %p71, %p72
    %p74 = scmp.ne.s32.totalorder %s66, %s68
    %p75 = scmp.eq.s32.totalorder %s16, 3
    %p76 = por %p74, %p75
    %p77 = scmp.ne.s32.totalorder %s68, %s69
    %p78 = scmp.eq.s32.totalorder %s16, 0
    %p79 = por %p77, %p78
    %p80 = scmp.ne.s32.totalorder %s68, %s69
    %p81 = scmp.eq.s32.totalorder %s17, 3
    %p82 = por %p80, %p81
    %p84 = scmp.ne.s32.totalorder %s69, %s83
    %p85 = scmp.eq.s32.totalorder %s17, 0
    %p86 = por %p84, %p85
    %s88 = sadd.s32 %s87, 1
    %p91 = scmp.eq.s32.totalorder %s11, 3
    %p92 = scmp.ne.s32.totalorder %s87, %s89
    %p93 = scmp.eq.s32.totalorder %s11, 0
    %p94 = por %p92, %p93
    %p95 = scmp.ne.s32.totalorder %s87, %s89
    %p96 = scmp.eq.s32.totalorder %s16, 3
    %p97 = por %p95, %p96
    %p98 = scmp.ne.s32.totalorder %s89, %s90
    %p99 = scmp.eq.s32.totalorder %s16, 0
    %p100 = por %p98, %p99
    %p101 = scmp.ne.s32.totalorder %s89, %s90
    %p102 = scmp.eq.s32.totalorder %s17, 3
    %p103 = por %p101, %p102
    %p105 = scmp.ne.s32.totalorder %s90, %s104
    %p106 = scmp.eq.s32.totalorder %s17, 0
    %p107 = por %p105, %p106
    %s109 = sadd.s32 %s108, 1
    %p112 = scmp.eq.s32.totalorder %s11, 3
    %p113 = scmp.ne.s32.totalorder %s108, %s110
    %p114 = scmp.eq.s32.totalorder %s11, 0
    %p115 = por %p113, %p114
    %p116 = scmp.ne.s32.totalorder %s108, %s110
    %p117 = scmp.eq.s32.totalorder %s16, 3
    %p118 = por %p116, %p117
    %p119 = scmp.ne.s32.totalorder %s110, %s111
    %p120 = scmp.eq.s32.totalorder %s16, 0
    %p121 = por %p119, %p120
    %p122 = scmp.ne.s32.totalorder %s110, %s111
    %p123 = scmp.eq.s32.totalorder %s17, 3
    %p124 = por %p122, %p123
    %p126 = scmp.ne.s32.totalorder %s111, %s125
    %p127 = scmp.eq.s32.totalorder %s17, 0
    %p128 = por %p126, %p127
    %s129 = ssub.s32 %s11, %s18
    %p130 = scmp.eq.s32.totalorder %s129, 0
    %s132 = sadd.s32 %s131, 1
    %s133 = scalar_select %p130, %s131, %s132
    %p136 = pneg %p130
    %p137 = scmp.eq.s32.totalorder %s11, 3
    %p138 = por %p136, %p137
    %p139 = scmp.ne.s32.totalorder %s131, %s134
    %p140 = scmp.eq.s32.totalorder %s11, 0
    %p141 = por %p139, %p140
    %p142 = scmp.ne.s32.totalorder %s131, %s134
    %p143 = scmp.eq.s32.totalorder %s16, 3
    %p144 = por %p142, %p143
    %p145 = scmp.ne.s32.totalorder %s134, %s135
    %p146 = scmp.eq.s32.totalorder %s16, 0
    %p147 = por %p145, %p146
    %p148 = scmp.ne.s32.totalorder %s134, %s135
    %p149 = scmp.eq.s32.totalorder %s17, 3
    %p150 = por %p148, %p149
    %p152 = scmp.ne.s32.totalorder %s135, %s151
    %p153 = scmp.eq.s32.totalorder %s17, 0
    %p154 = por %p152, %p153
    %p155 = scmp.le.s32.totalorder 1, %s11
    %p156 = scmp.lt.s32.totalorder %s11, 5
    %p157 = pnand %p155, %p156
    %p158 = pneg %p157
    // Predicated region
    $region9: #{tpu_custom_call.1} parent=5 // pred_check
      _
    $region10: #{tpu_custom_call.1} parent=5 // pred_check_branch
      %160 = sbr.rel (%p157) target = $region12
    $region11: #{tpu_custom_call.1} parent=5 // pred_region
      %s161 = ssub.s32 %s11, 1
      // Predicated region
      $region13: #{tpu_custom_call.1} parent=11 // pred_check
        %p162 = pneg %p58
      $region14: #{tpu_custom_call.1} parent=11 // pred_check_branch
        %164 = sbr.rel (%p162) target = $region16
      $region15: #{tpu_custom_call.1} parent=11 // pred_region
        _
      $region16: #{tpu_custom_call.1} parent=11 // pred_fallthru
        _
      // Predicated region
      $region17: #{tpu_custom_call.1} parent=11 // pred_check
        %p165 = pneg %p79
      $region18: #{tpu_custom_call.1} parent=11 // pred_check_branch
        %167 = sbr.rel (%p165) target = $region20
      $region19: #{tpu_custom_call.1} parent=11 // pred_region
        _
      $region20: #{tpu_custom_call.1} parent=11 // pred_fallthru
        _
      // Predicated region
      $region21: #{tpu_custom_call.1} parent=11 // pred_check
        %p168 = pneg %p100
      $region22: #{tpu_custom_call.1} parent=11 // pred_check_branch
        %170 = sbr.rel (%p168) target = $region24
      $region23: #{tpu_custom_call.1} parent=11 // pred_region
        _
      $region24: #{tpu_custom_call.1} parent=11 // pred_fallthru
        _
      // Predicated region
      $region25: #{tpu_custom_call.1} parent=11 // pred_check
        %p171 = pneg %p121
      $region26: #{tpu_custom_call.1} parent=11 // pred_check_branch
        %173 = sbr.rel (%p171) target = $region28
      $region27: #{tpu_custom_call.1} parent=11 // pred_region
        _
      $region28: #{tpu_custom_call.1} parent=11 // pred_fallthru
        _
    $region12: #{tpu_custom_call.1} parent=5 // pred_fallthru
      _
    %p174 = scmp.lt.s32.totalorder %s11, 4
    // Predicated region
    $region29: #{tpu_custom_call.1} parent=5 // pred_check
      %p175 = pneg %p174
    $region30: #{tpu_custom_call.1} parent=5 // pred_check_branch
      %177 = sbr.rel (%p175) target = $region32
    $region31: #{tpu_custom_call.1} parent=5 // pred_region
      // Predicated region
      $region33: #{tpu_custom_call.1} parent=31 // pred_check
        %p178 = pneg %p31
      $region34: #{tpu_custom_call.1} parent=31 // pred_check_branch
        %180 = sbr.rel (%p178) target = $region36
      $region35: #{tpu_custom_call.1} parent=31 // pred_region
        %s181 = smul.u32 2, %s11
        %p182 = scmp.lt.s32.totalorder %s181, 7
        %s183 = scalar_select %p182, %s181, 7
        %s184 = smul.addr %s183, 4
        %s185 = smul.addr %s184, 8
        %s186 = scalar_lea.vmem %s0, %s185
        %s187 = smul.u32 2, %s11
      $region36: #{tpu_custom_call.1} parent=31 // pred_fallthru
        _
    $region32: #{tpu_custom_call.1} parent=5 // pred_fallthru
      _
    %p188 = scmp.le.s32.totalorder 1, %s11
    %p189 = scmp.lt.s32.totalorder %s11, 5
    %p190 = pnand %p188, %p189
    %p191 = pneg %p190
    // Predicated region
    $region37: #{tpu_custom_call.1} parent=5 // pred_check
      _
    $region38: #{tpu_custom_call.1} parent=5 // pred_check_branch
      %193 = sbr.rel (%p190) target = $region40
    $region39: #{tpu_custom_call.1} parent=5 // pred_region
      %s194 = ssub.s32 %s11, 1
      %s195 = smul.u32 2, %s16
      %p196 = scmp.lt.s32.totalorder %s195, 7
      %s197 = scalar_select %p196, %s195, 7
      %s198 = smul.addr %s197, 4
      %s199 = smul.addr %s198, 8
      %s200 = scalar_lea.vmem %s0, %s199
      %p201 = pneg %p37
      %p202 = pneg %p34
      %p203 = pneg %p58
      %p204 = pneg %p55
      %p205 = pneg %p79
      %p206 = pneg %p76
      %p207 = pneg %p100
      %p208 = pneg %p97
      %p209 = pneg %p121
      %p210 = pneg %p118
      %p211 = pneg %p147
      %p212 = pneg %p144
      %s213 = smul.u32 2, %s16
      %p214 = scmp.lt.s32.totalorder %s213, 7
      %s215 = scalar_select %p214, %s213, 7
      %s216 = smul.addr %s215, 8
      %s217 = scalar_lea.vmem %s5, %s216
      %s218 = smul.u32 2, %s16
      %p219 = scmp.lt.s32.totalorder %s218, 7
      %s220 = scalar_select %p219, %s218, 7
      %s221 = smul.addr %s220, 4
      %s222 = smul.addr %s221, 8
      %s223 = scalar_lea.vmem %s0, %s222
      %s224 = smul.u32 2, %s16
      %s225 = smul.u32 2, %s16
      %p226 = scmp.lt.s32.totalorder %s225, 7
      %s227 = scalar_select %p226, %s225, 7
      %s228 = smul.addr %s227, 8
      %s229 = scalar_lea.vmem %s5, %s228
      %s230 = smul.u32 2, %s16
      %v231 = vld [vmem:[%s223] sm:$0xff]
      %v232 = vld [vmem:[%s223 + $0x8] sm:$0xff]
      %v233 = vld [vmem:[%s223 + $0x10] sm:$0xff]
      %v234 = vld [vmem:[%s223 + $0x18] sm:$0xff]
      %v235 = vld [vmem:[%s223 + $0x20] sm:$0xff]
      %v236 = vld [vmem:[%s223 + $0x28] sm:$0xff]
      %v237 = vld [vmem:[%s223 + $0x30] sm:$0xff]
      %v238 = vld [vmem:[%s223 + $0x38] sm:$0xff]
      %v239 = vld [vmem:[%s1] sm:$0xff]
      %v240 = vld [vmem:[%s1 + $0x8] sm:$0xff]
      %v241 = vld [vmem:[%s1 + $0x10] sm:$0xff]
      %v242 = vld [vmem:[%s1 + $0x18] sm:$0xff]
      %v243 = vld [vmem:[%s1 + $0x20] sm:$0xff]
      %v244 = vld [vmem:[%s1 + $0x28] sm:$0xff]
      %v245 = vld [vmem:[%s1 + $0x30] sm:$0xff]
      %v246 = vld [vmem:[%s1 + $0x38] sm:$0xff]
      %v247 = vld [vmem:[%s1 + $0x40] sm:$0xff]
      %v248 = vld [vmem:[%s1 + $0x48] sm:$0xff]
      %v249 = vld [vmem:[%s1 + $0x50] sm:$0xff]
      %v250 = vld [vmem:[%s1 + $0x58] sm:$0xff]
      %v251 = vld [vmem:[%s1 + $0x60] sm:$0xff]
      %v252 = vld [vmem:[%s1 + $0x68] sm:$0xff]
      %v253 = vld [vmem:[%s1 + $0x70] sm:$0xff]
      %v254 = vld [vmem:[%s1 + $0x78] sm:$0xff]
      %v255 = vld [vmem:[%s1 + $0x80] sm:$0xff]
      %v256 = vld [vmem:[%s1 + $0x88] sm:$0xff]
      %v257 = vld [vmem:[%s1 + $0x90] sm:$0xff]
      %v258 = vld [vmem:[%s1 + $0x98] sm:$0xff]
      %v259 = vld [vmem:[%s1 + $0xa0] sm:$0xff]
      %v260 = vld [vmem:[%s1 + $0xa8] sm:$0xff]
      %v261 = vld [vmem:[%s1 + $0xb0] sm:$0xff]
      %v262 = vld [vmem:[%s1 + $0xb8] sm:$0xff]
      %v263 = vld [vmem:[%s1 + $0xc0] sm:$0xff]
      %v264 = vld [vmem:[%s1 + $0xc8] sm:$0xff]
      %v265 = vld [vmem:[%s1 + $0xd0] sm:$0xff]
      %v266 = vld [vmem:[%s1 + $0xd8] sm:$0xff]
      %v267 = vld [vmem:[%s1 + $0xe0] sm:$0xff]
      %v268 = vld [vmem:[%s1 + $0xe8] sm:$0xff]
      %v269 = vld [vmem:[%s1 + $0xf0] sm:$0xff]
      %v270 = vld [vmem:[%s1 + $0xf8] sm:$0xff]
      %v271 = vld [vmem:[%s1 + $0x100] sm:$0xff]
      %v272 = vld [vmem:[%s1 + $0x108] sm:$0xff]
      %v273 = vld [vmem:[%s1 + $0x110] sm:$0xff]
      %v274 = vld [vmem:[%s1 + $0x118] sm:$0xff]
      %v275 = vld [vmem:[%s1 + $0x120] sm:$0xff]
      %v276 = vld [vmem:[%s1 + $0x128] sm:$0xff]
      %v277 = vld [vmem:[%s1 + $0x130] sm:$0xff]
      %v278 = vld [vmem:[%s1 + $0x138] sm:$0xff]
      %v279 = vld [vmem:[%s1 + $0x140] sm:$0xff]
      %v280 = vld [vmem:[%s1 + $0x148] sm:$0xff]
      %v281 = vld [vmem:[%s1 + $0x150] sm:$0xff]
      %v282 = vld [vmem:[%s1 + $0x158] sm:$0xff]
      %v283 = vld [vmem:[%s1 + $0x160] sm:$0xff]
      %v284 = vld [vmem:[%s1 + $0x168] sm:$0xff]
      %v285 = vld [vmem:[%s1 + $0x170] sm:$0xff]
      %v286 = vld [vmem:[%s1 + $0x178] sm:$0xff]
      %v287 = vld [vmem:[%s1 + $0x180] sm:$0xff]
      %v288 = vld [vmem:[%s1 + $0x188] sm:$0xff]
      %v289 = vld [vmem:[%s1 + $0x190] sm:$0xff]
      %v290 = vld [vmem:[%s1 + $0x198] sm:$0xff]
      %v291 = vld [vmem:[%s1 + $0x1a0] sm:$0xff]
      %v292 = vld [vmem:[%s1 + $0x1a8] sm:$0xff]
      %v293 = vld [vmem:[%s1 + $0x1b0] sm:$0xff]
      %v294 = vld [vmem:[%s1 + $0x1b8] sm:$0xff]
      %v295 = vld [vmem:[%s1 + $0x1c0] sm:$0xff]
      %v296 = vld [vmem:[%s1 + $0x1c8] sm:$0xff]
      %v297 = vld [vmem:[%s1 + $0x1d0] sm:$0xff]
      %v298 = vld [vmem:[%s1 + $0x1d8] sm:$0xff]
      %v299 = vld [vmem:[%s1 + $0x1e0] sm:$0xff]
      %v300 = vld [vmem:[%s1 + $0x1e8] sm:$0xff]
      %v301 = vld [vmem:[%s1 + $0x1f0] sm:$0xff]
      %v302 = vld [vmem:[%s1 + $0x1f8] sm:$0xff]
      %v303 = vld [vmem:[%s2] sm:$0x1]
      %v305 = vlaneseq
      %v306 = vshrl.u32 %v305, 7
      %v307 = vsub.s32 0, %v306
      %v308 = vrot.slane %v303, %v307
      %310 = vmatprep.subr.mxu0 0.0
      %311 = vmatpush1.msra.mxu0 %v239
      %312 = vmatprep.subr.mxu0 0.0
      %313 = vmatpush1.msra.mxu0 %v240
      %314 = vmatprep.subr.mxu0 0.0
      %315 = vmatpush1.msra.mxu0 %v241
      %316 = vmatprep.subr.mxu0 0.0
      %317 = vmatpush1.msra.mxu0 %v242
      %318 = vmatprep.subr.mxu0 0.0
      %319 = vmatpush1.msra.mxu0 %v243
      %320 = vmatprep.subr.mxu0 0.0
      %321 = vmatpush1.msra.mxu0 %v244
      %322 = vmatprep.subr.mxu0 0.0
      %323 = vmatpush1.msra.mxu0 %v245
      %324 = vmatprep.subr.mxu0 0.0
      %325 = vmatpush1.msra.mxu0 %v246
      %326 = vmatprep.subr.mxu0 0.0
      %327 = vmatpush1.msra.mxu0 %v247
      %328 = vmatprep.subr.mxu0 0.0
      %329 = vmatpush1.msra.mxu0 %v248
      %330 = vmatprep.subr.mxu0 0.0
      %331 = vmatpush1.msra.mxu0 %v249
      %332 = vmatprep.subr.mxu0 0.0
      %333 = vmatpush1.msra.mxu0 %v250
      %334 = vmatprep.subr.mxu0 0.0
      %335 = vmatpush1.msra.mxu0 %v251
      %336 = vmatprep.subr.mxu0 0.0
      %337 = vmatpush1.msra.mxu0 %v252
      %338 = vmatprep.subr.mxu0 0.0
      %339 = vmatpush1.msra.mxu0 %v253
      %340 = vmatprep.subr.mxu0 0.0
      %341 = vmatpush1.msra.mxu0 %v254
      %342 = vmatprep.subr.mxu0 0.0
      %343 = vmatpush1.msra.mxu0 %v255
      %344 = vmatprep.subr.mxu0 0.0
      %345 = vmatpush1.msra.mxu0 %v256
      %346 = vmatprep.subr.mxu0 0.0
      %347 = vmatpush1.msra.mxu0 %v257
      %348 = vmatprep.subr.mxu0 0.0
      %349 = vmatpush1.msra.mxu0 %v258
      %350 = vmatprep.subr.mxu0 0.0
      %351 = vmatpush1.msra.mxu0 %v259
      %352 = vmatprep.subr.mxu0 0.0
      %353 = vmatpush1.msra.mxu0 %v260
      %354 = vmatprep.subr.mxu0 0.0
      %355 = vmatpush1.msra.mxu0 %v261
      %356 = vmatprep.subr.mxu0 0.0
      %357 = vmatpush1.msra.mxu0 %v262
      %358 = vmatprep.subr.mxu0 0.0
      %359 = vmatpush1.msra.mxu0 %v263
      %360 = vmatprep.subr.mxu0 0.0
      %361 = vmatpush1.msra.mxu0 %v264
      %362 = vmatprep.subr.mxu0 0.0
      %363 = vmatpush1.msra.mxu0 %v265
      %364 = vmatprep.subr.mxu0 0.0
      %365 = vmatpush1.msra.mxu0 %v266
      %366 = vmatprep.subr.mxu0 0.0
      %367 = vmatpush1.msra.mxu0 %v267
      %368 = vmatprep.subr.mxu0 0.0
      %369 = vmatpush1.msra.mxu0 %v268
      %370 = vmatprep.subr.mxu0 0.0
      %371 = vmatpush1.msra.mxu0 %v269
      %372 = vmatprep.subr.mxu0 0.0
      %373 = vmatpush1.msra.mxu0 %v270
      %374 = vmatprep.mubr.f32.mxu0 %v232
      %375 = vmatmul.mubr.f32.gmra.mrb[0].mxu0 %v231
      %v376 = vpop.f32.mrb[0].mxu0
      %v377 = vadd.f32 %v308, %v376
      %v378 = vpop.f32.mrb[0].mxu0
      %379 = vmatprep.mubr.f32.mxu0 %v236
      %380 = vmatmul.mubr.f32.gmra.mrb[0].mxu0 %v235
      %v381 = vpop.f32.mrb[0].mxu0
      %v382 = vadd.f32 %v308, %v381
      %v383 = vpop.f32.mrb[0].mxu0
      %384 = vdwg.mxu0
      %385 = vmatprep.subr.mxu0 0.0
      %386 = vmatpush1.msra.mxu0 %v271
      %387 = vmatprep.subr.mxu0 0.0
      %388 = vmatpush1.msra.mxu0 %v272
      %389 = vmatprep.subr.mxu0 0.0
      %390 = vmatpush1.msra.mxu0 %v273
      %391 = vmatprep.subr.mxu0 0.0
      %392 = vmatpush1.msra.mxu0 %v274
      %393 = vmatprep.subr.mxu0 0.0
      %394 = vmatpush1.msra.mxu0 %v275
      %395 = vmatprep.subr.mxu0 0.0
      %396 = vmatpush1.msra.mxu0 %v276
      %397 = vmatprep.subr.mxu0 0.0
      %398 = vmatpush1.msra.mxu0 %v277
      %399 = vmatprep.subr.mxu0 0.0
      %400 = vmatpush1.msra.mxu0 %v278
      %401 = vmatprep.subr.mxu0 0.0
      %402 = vmatpush1.msra.mxu0 %v279
      %403 = vmatprep.subr.mxu0 0.0
      %404 = vmatpush1.msra.mxu0 %v280
      %405 = vmatprep.subr.mxu0 0.0
      %406 = vmatpush1.msra.mxu0 %v281
      %407 = vmatprep.subr.mxu0 0.0
      %408 = vmatpush1.msra.mxu0 %v282
      %409 = vmatprep.subr.mxu0 0.0
      %410 = vmatpush1.msra.mxu0 %v283
      %411 = vmatprep.subr.mxu0 0.0
      %412 = vmatpush1.msra.mxu0 %v284
      %413 = vmatprep.subr.mxu0 0.0
      %414 = vmatpush1.msra.mxu0 %v285
      %415 = vmatprep.subr.mxu0 0.0
      %416 = vmatpush1.msra.mxu0 %v286
      %417 = vmatprep.subr.mxu0 0.0
      %418 = vmatpush1.msra.mxu0 %v287
      %419 = vmatprep.subr.mxu0 0.0
      %420 = vmatpush1.msra.mxu0 %v288
      %421 = vmatprep.subr.mxu0 0.0
      %422 = vmatpush1.msra.mxu0 %v289
      %423 = vmatprep.subr.mxu0 0.0
      %424 = vmatpush1.msra.mxu0 %v290
      %425 = vmatprep.subr.mxu0 0.0
      %426 = vmatpush1.msra.mxu0 %v291
      %427 = vmatprep.subr.mxu0 0.0
      %428 = vmatpush1.msra.mxu0 %v292
      %429 = vmatprep.subr.mxu0 0.0
      %430 = vmatpush1.msra.mxu0 %v293
      %431 = vmatprep.subr.mxu0 0.0
      %432 = vmatpush1.msra.mxu0 %v294
      %433 = vmatprep.subr.mxu0 0.0
      %434 = vmatpush1.msra.mxu0 %v295
      %435 = vmatprep.subr.mxu0 0.0
      %436 = vmatpush1.msra.mxu0 %v296
      %437 = vmatprep.subr.mxu0 0.0
      %438 = vmatpush1.msra.mxu0 %v297
      %439 = vmatprep.subr.mxu0 0.0
      %440 = vmatpush1.msra.mxu0 %v298
      %441 = vmatprep.subr.mxu0 0.0
      %442 = vmatpush1.msra.mxu0 %v299
      %443 = vmatprep.subr.mxu0 0.0
      %444 = vmatpush1.msra.mxu0 %v300
      %445 = vmatprep.subr.mxu0 0.0
      %446 = vmatpush1.msra.mxu0 %v301
      %447 = vmatprep.subr.mxu0 0.0
      %448 = vmatpush1.msra.mxu0 %v302
      %449 = vmatprep.mubr.f32.mxu0 %v234
      %450 = vmatmul.mubr.f32.gmra.mrb[0].mxu0 %v233
      %v451 = vpop.f32.mrb[0].mxu0
      %v452 = vadd.f32 %v377, %v451
      %v453 = vpop.f32.mrb[0].mxu0
      %454 = vmatprep.mubr.f32.mxu0 %v238
      %455 = vmatmul.mubr.f32.gmra.mrb[0].mxu0 %v237
      %v456 = vpop.f32.mrb[0].mxu0
      %v457 = vadd.f32 %v382, %v456
      %v458 = vpop.f32.mrb[0].mxu0
      %459 = vdwg.mxu0
      %v460 = vmax.f32 %v452, 0.0
      %v461 = vmax.f32 %v457, 0.0
      %v462 = vld [vmem:[%s3] sm:$0xff]
      %v463 = vld [vmem:[%s3 + $0x8] sm:$0xff]
      %v464 = vld [vmem:[%s3 + $0x10] sm:$0xff]
      %v465 = vld [vmem:[%s3 + $0x18] sm:$0xff]
      %v466 = vld [vmem:[%s4] sm:$0x1]
      %v468 = vlaneseq
      %v469 = vshrl.u32 %v468, 7
      %v470 = vsub.s32 0, %v469
      %v471 = vrot.slane %v466, %v470
      %vm473 = vcmask 261120
      %v475 = vsel %vm473, %v460, 0
      %v478 = vsel %vm473, %v461, 0
      %480 = vmatprep.subr.mxu0 0.0
      %481 = vmatpush1.msra.mxu0 %v462
      %482 = vmatprep.subr.mxu0 0.0
      %483 = vmatpush1.msra.mxu0 %v463
      %484 = vmatprep.subr.mxu0 0.0
      %485 = vmatpush1.msra.mxu0 %v464
      %486 = vmatprep.subr.mxu0 0.0
      %487 = vmatpush1.msra.mxu0 %v465
      %488 = vmatprep.subr.mxu0 0.0
      %489 = vmatpush1.msra.mxu0 0.0
      %490 = vmatprep.subr.mxu0 0.0
      %491 = vmatpush1.msra.mxu0 0.0
      %492 = vmatprep.subr.mxu0 0.0
      %493 = vmatpush1.msra.mxu0 0.0
      %494 = vmatprep.subr.mxu0 0.0
      %495 = vmatpush1.msra.mxu0 0.0
      %496 = vmatprep.subr.mxu0 0.0
      %497 = vmatpush1.msra.mxu0 0.0
      %498 = vmatprep.subr.mxu0 0.0
      %499 = vmatpush1.msra.mxu0 0.0
      %500 = vmatprep.subr.mxu0 0.0
      %501 = vmatpush1.msra.mxu0 0.0
      %502 = vmatprep.subr.mxu0 0.0
      %503 = vmatpush1.msra.mxu0 0.0
      %504 = vmatprep.subr.mxu0 0.0
      %505 = vmatpush1.msra.mxu0 0.0
      %506 = vmatprep.subr.mxu0 0.0
      %507 = vmatpush1.msra.mxu0 0.0
      %508 = vmatprep.subr.mxu0 0.0
      %509 = vmatpush1.msra.mxu0 0.0
      %510 = vmatprep.subr.mxu0 0.0
      %511 = vmatpush1.msra.mxu0 0.0
      %512 = vmatprep.subr.mxu0 0.0
      %513 = vmatpush1.msra.mxu0 0.0
      %514 = vmatprep.subr.mxu0 0.0
      %515 = vmatpush1.msra.mxu0 0.0
      %516 = vmatprep.subr.mxu0 0.0
      %517 = vmatpush1.msra.mxu0 0.0
      %518 = vmatprep.subr.mxu0 0.0
      %519 = vmatpush1.msra.mxu0 0.0
      %520 = vmatprep.subr.mxu0 0.0
      %521 = vmatpush1.msra.mxu0 0.0
      %522 = vmatprep.subr.mxu0 0.0
      %523 = vmatpush1.msra.mxu0 0.0
      %524 = vmatprep.subr.mxu0 0.0
      %525 = vmatpush1.msra.mxu0 0.0
      %526 = vmatprep.subr.mxu0 0.0
      %527 = vmatpush1.msra.mxu0 0.0
      %528 = vmatprep.subr.mxu0 0.0
      %529 = vmatpush1.msra.mxu0 0.0
      %530 = vmatprep.subr.mxu0 0.0
      %531 = vmatpush1.msra.mxu0 0.0
      %532 = vmatprep.subr.mxu0 0.0
      %533 = vmatpush1.msra.mxu0 0.0
      %534 = vmatprep.subr.mxu0 0.0
      %535 = vmatpush1.msra.mxu0 0.0
      %536 = vmatprep.subr.mxu0 0.0
      %537 = vmatpush1.msra.mxu0 0.0
      %538 = vmatprep.subr.mxu0 0.0
      %539 = vmatpush1.msra.mxu0 0.0
      %540 = vmatprep.subr.mxu0 0.0
      %541 = vmatpush1.msra.mxu0 0.0
      %542 = vmatprep.subr.mxu0 0.0
      %543 = vmatpush1.msra.mxu0 0.0
      %544 = vmatprep.mubr.f32.mxu0 0.0
      %545 = vmatmul.mubr.f32.gmra.mrb[0].mxu0 %v475
      %v546 = vpop.f32.mrb[0].mxu0
      %v547 = vadd.f32 %v471, %v546
      %v548 = vpop.f32.mrb[0].mxu0
      %549 = vmatprep.mubr.f32.mxu0 0.0
      %550 = vmatmul.mubr.f32.gmra.mrb[0].mxu0 %v478
      %v551 = vpop.f32.mrb[0].mxu0
      %v552 = vadd.f32 %v471, %v551
      %v553 = vpop.f32.mrb[0].mxu0
      %554 = vdwg.mxu0
      %vm555 = vcmask 80896
      %v556 = vsel %vm555, %v547, -inf
      %557 = vmax.xlane.f32.xlu0 %v556
      %v558 = vpop.xlane.xlu0 %557
      %v559 = vsel %vm555, %v552, -inf
      %560 = vmax.xlane.f32.xlu0 %v559
      %v561 = vpop.xlane.xlu0 %560
      %v562 = vsub.f32 %v547, %v558
      %v563 = vsub.f32 %v552, %v561
      %v564 = vmul.f32 %v562, 1.442695
      %v565 = vpow.pop %v564
      %v566 = vmul.f32 %v563, 1.442695
      %v567 = vpow.pop %v566
      %v568 = vsel %vm555, %v565, 0.0
      %569 = vadd.xlane.f32.xlu0 %v568
      %v570 = vpop.xlane.xlu0 %569
      %v571 = vsel %vm555, %v567, 0.0
      %572 = vadd.xlane.f32.xlu0 %v571
      %v573 = vpop.xlane.xlu0 %572
      %v574 = vrcp.pop %v570
      %v575 = vmul.f32 %v565, %v574
      %v576 = vrcp.pop %v573
      %v577 = vmul.f32 %v567, %v576
      %578 = vst.msk [vmem:[%s229] sm:$0xff] %vm555, %v575
      %579 = vst.msk [vmem:[%s229 + $0x8] sm:$0xff] %vm555, %v577
      %s580 = smul.u32 2, %s16
      %p581 = scmp.lt.s32.totalorder %s580, 7
      %s582 = scalar_select %p581, %s580, 7
      %s583 = smul.addr %s582, 8
      %s584 = scalar_lea.vmem %s5, %s583
      // Predicated region
      $region41: #{tpu_custom_call.1} parent=39 // pred_check
        %p585 = pneg %p144
      $region42: #{tpu_custom_call.1} parent=39 // pred_check_branch
        %587 = sbr.rel (%p585) target = $region44
      $region43: #{tpu_custom_call.1} parent=39 // pred_region
        %s588 = smul.u32 2, %s16
      $region44: #{tpu_custom_call.1} parent=39 // pred_fallthru
        _
    $region40: #{tpu_custom_call.1} parent=5 // pred_fallthru
      _
    %p589 = scmp.le.s32.totalorder 2, %s11
    // Predicated region
    $region45: #{tpu_custom_call.1} parent=5 // pred_check
      %p590 = pneg %p589
    $region46: #{tpu_custom_call.1} parent=5 // pred_check_branch
      %592 = sbr.rel (%p590) target = $region48
    $region47: #{tpu_custom_call.1} parent=5 // pred_region
      %s593 = ssub.s32 %s11, 2
      // Predicated region
      $region49: #{tpu_custom_call.1} parent=47 // pred_check
        %p594 = pneg %p150
      $region50: #{tpu_custom_call.1} parent=47 // pred_check_branch
        %596 = sbr.rel (%p594) target = $region52
      $region51: #{tpu_custom_call.1} parent=47 // pred_region
        %s597 = smul.u32 2, %s17
        %p598 = scmp.lt.s32.totalorder %s597, 7
        %s599 = scalar_select %p598, %s597, 7
        %s600 = smul.addr %s599, 8
        %s601 = scalar_lea.vmem %s5, %s600
      $region52: #{tpu_custom_call.1} parent=47 // pred_fallthru
        _
    $region48: #{tpu_custom_call.1} parent=5 // pred_fallthru
      _
  $region6: #{tpu_custom_call.1} parent=0 // loop_footer
    %s15 = sadd.s32 1, %s11
  $region7: #{tpu_custom_call.1} parent=0 // loop_footer_branch
    %10 = sbr.rel target = $region3
  $region8: #{tpu_custom_call.1} parent=0 // loop_exit
    _

</llo_original>
